<compile_context>
chip_gen: v5e
topology: v5e:2x2
jax: 0.10.0
libtpu: 0.0.40
codegen_flags: <defaults>
</compile_context>

<pallas_src>
import functools

import jax
import jax.numpy as jnp
from jax.experimental import pallas as pl
from jax.experimental.pallas import tpu as pltpu


def _cdiv(a, b):
    return -(-a // b)


def _round_up(a, m):
    return _cdiv(a, m) * m


@functools.lru_cache(maxsize=None)
def _vmem_budget():
    """Returns (vmem_limit_bytes, target_block_size_in_f32_elements)."""
    limit, target_bytes = 32 * 1024 * 1024, 2 << 20        # safe on v7x (64 MiB VMEM)
    try:
        info = pltpu.get_tpu_info()
        cap = getattr(info, "vmem_capacity_bytes", None)
        if cap is not None and cap >= 100 * 1024 * 1024:   # v5e / v6e: 128 MiB VMEM
            limit, target_bytes = 64 * 1024 * 1024, 4 << 20
    except Exception:
        pass
    return limit, target_bytes // 4


# ----------------------------------------------------------------------------
# channels_last kernel: normalize over the LANE axis (last dim C) of (R, C).
# ----------------------------------------------------------------------------
def _ln_rows_kernel(x_ref, w_ref, b_ref, o_ref, *, eps):
    # x_ref: (row_block, C); w_ref / b_ref: (1, C).
    x = x_ref[...].astype(jnp.float32)
    mean = jnp.mean(x, axis=-1, keepdims=True)
    mean_sq = jnp.mean(x * x, axis=-1, keepdims=True)        # one pass over the block
    var = jnp.maximum(mean_sq - mean * mean, 0.0)             # biased variance, f32
    inv = jax.lax.rsqrt(var + eps)
    w = w_ref[...].astype(jnp.float32)
    b = b_ref[...].astype(jnp.float32)
    o_ref[...] = ((x - mean) * inv * w + b).astype(o_ref.dtype)


def _pick_row_block(R, C, target_elems, min_steps=8):
    blk = max(8, min(target_elems // max(1, C), 8192))
    blk = (blk // 8) * 8                                      # sublane alignment
    # Cap the block so the grid keeps >= min_steps steps when R allows it
    # (pipelining overlap on all gens, work-split across v7x's two TCs).
    cap = max(8, _round_up(_cdiv(R, min_steps), 8))
    blk = min(blk, cap)
    return R if blk >= R else blk


def _layernorm_rows(x2d, weight, bias, eps, row_block=None):
    """LayerNorm over the last axis of a 2-D array (R, C)."""
    R, C = x2d.shape
    vmem_limit, target_elems = _vmem_budget()
    if row_block is None:
        row_block = _pick_row_block(R, C, target_elems)
    grid = (_cdiv(R, row_block),)
    w2d = weight.reshape(1, C)
    b2d = bias.reshape(1, C)
    itemsize = x2d.dtype.itemsize
    cost = pl.CostEstimate(
        flops=10 * R * C,
        transcendentals=R,
        bytes_accessed=2 * R * C * itemsize + 2 * C * 4,
    )
    return pl.pallas_call(
        functools.partial(_ln_rows_kernel, eps=eps),
        out_shape=jax.ShapeDtypeStruct((R, C), x2d.dtype),
        grid_spec=pltpu.PrefetchScalarGridSpec(
            num_scalar_prefetch=0,
            grid=grid,
            in_specs=[
                pl.BlockSpec((row_block, C), lambda i: (i, 0)),
                pl.BlockSpec((1, C), lambda i: (0, 0)),
                pl.BlockSpec((1, C), lambda i: (0, 0)),
            ],
            out_specs=pl.BlockSpec((row_block, C), lambda i: (i, 0)),
        ),
        compiler_params=pltpu.CompilerParams(
            dimension_semantics=("parallel",),
            vmem_limit_bytes=vmem_limit,
        ),
        cost_estimate=cost,
    )(x2d, w2d, b2d)


# ----------------------------------------------------------------------------
# channels_first kernel: x is (B, C, H*W); normalize over the SUBLANE axis C,
# spatial on lanes, batch blocked.  No XLA transpose of the NCHW tensor.
# ----------------------------------------------------------------------------
def _ln_channels_kernel(x_ref, w_ref, b_ref, o_ref, *, eps):
    # x_ref: (b_block, C, hw_block); w_ref / b_ref: (1, C, 1).
    x = x_ref[...].astype(jnp.float32)
    mean = jnp.mean(x, axis=1, keepdims=True)                 # (b_block, 1, hw_block)
    mean_sq = jnp.mean(x * x, axis=1, keepdims=True)
    var = jnp.maximum(mean_sq - mean * mean, 0.0)
    inv = jax.lax.rsqrt(var + eps)
    w = w_ref[...].astype(jnp.float32)
    b = b_ref[...].astype(jnp.float32)
    o_ref[...] = ((x - mean) * inv * w + b).astype(o_ref.dtype)


def _pick_cf_blocks(B, C, HW, target_elems, min_steps=8):
    # Lane (last) dim: multiple of 128, or the full extent HW.
    if HW <= 128:
        hw_block = HW
    else:
        blk = max(128, (target_elems // max(1, C)) // 128 * 128)
        lane_steps = max(1, _cdiv(min_steps, B))               # steps batch can't provide
        blk = min(blk, max(128, _round_up(_cdiv(HW, lane_steps), 128)))
        hw_block = HW if blk >= HW else blk
    hw_steps = _cdiv(HW, hw_block)
    # Batch dim: fold whole images into one (contiguous) block only when the
    # block already spans the full spatial extent; cap so the grid keeps steps.
    if hw_block == HW:
        b_block = max(1, min(B, target_elems // max(1, C * HW)))
        b_cap = max(1, _cdiv(B, max(1, _cdiv(min_steps, hw_steps))))
        b_block = min(b_block, b_cap)
    else:
        b_block = 1
    return b_block, hw_block


def _layernorm_channels_first(x, weight, bias, eps, blocks=None):
    B, C, H, W = x.shape
    HW = H * W
    x3 = x.reshape(B, C, HW)                  # contiguous reshape: no data movement
    vmem_limit, target_elems = _vmem_budget()
    if blocks is None:
        b_block, hw_block = _pick_cf_blocks(B, C, HW, target_elems)
    else:
        b_block, hw_block = blocks
    grid = (_cdiv(B, b_block), _cdiv(HW, hw_block))
    w3 = weight.reshape(1, C, 1)
    b3 = bias.reshape(1, C, 1)
    itemsize = x.dtype.itemsize
    cost = pl.CostEstimate(
        flops=10 * B * C * HW,
        transcendentals=B * HW,
        bytes_accessed=2 * B * C * HW * itemsize + 2 * C * 4,
    )
    y3 = pl.pallas_call(
        functools.partial(_ln_channels_kernel, eps=eps),
        out_shape=jax.ShapeDtypeStruct((B, C, HW), x.dtype),
        grid_spec=pltpu.PrefetchScalarGridSpec(
            num_scalar_prefetch=0,
            grid=grid,
            in_specs=[
                pl.BlockSpec((b_block, C, hw_block), lambda bi, j: (bi, 0, j)),
                pl.BlockSpec((1, C, 1), lambda bi, j: (0, 0, 0)),
                pl.BlockSpec((1, C, 1), lambda bi, j: (0, 0, 0)),
            ],
            out_specs=pl.BlockSpec((b_block, C, hw_block), lambda bi, j: (bi, 0, j)),
        ),
        compiler_params=pltpu.CompilerParams(
            dimension_semantics=("parallel", "parallel"),
            vmem_limit_bytes=vmem_limit,
        ),
        cost_estimate=cost,
    )(x3, w3, b3)
    return y3.reshape(B, C, H, W)


# ----------------------------------------------------------------------------
# Module-equivalent wrapper.
# ----------------------------------------------------------------------------
class LayerNormPallas:
    def __init__(self, normalized_shape, eps=1e-6, data_format="channels_last"):
        if data_format not in ("channels_last", "channels_first"):
            raise NotImplementedError
        # Deterministic init per nn.Module.__init__: weight=ones, bias=zeros.
        self.weight = jnp.ones((normalized_shape,), dtype=jnp.float32)
        self.bias = jnp.zeros((normalized_shape,), dtype=jnp.float32)
        self.eps = eps
        self.data_format = data_format
        self.normalized_shape = (normalized_shape,)

    def __call__(self, x):
        C = self.normalized_shape[0]
        if self.data_format == "channels_last":
            assert x.shape[-1] == C
            lead = x.shape[:-1]
            y2d = _layernorm_rows(x.reshape(-1, C), self.weight, self.bias, self.eps)
            return y2d.reshape(*lead, C)
        else:  # channels_first: (B, C, H, W), normalize over dim 1
            assert x.shape[1] == C
            return _layernorm_channels_first(x, self.weight, self.bias, self.eps)


# ----------------------------------------------------------------------------
# Pure-JAX references.
# ----------------------------------------------------------------------------
def _ref_channels_last(x, w, b, eps):
    xf = x.astype(jnp.float32)
    mean = jnp.mean(xf, axis=-1, keepdims=True)
    var = jnp.mean((xf - mean) ** 2, axis=-1, keepdims=True)
    return ((xf - mean) / jnp.sqrt(var + eps) * w + b).astype(x.dtype)


def _ref_channels_first(x, w, b, eps):
    xf = x.astype(jnp.float32)
    u = jnp.mean(xf, axis=1, keepdims=True)
    s = jnp.mean((xf - u) ** 2, axis=1, keepdims=True)
    xn = (xf - u) / jnp.sqrt(s + eps)
    return (w[None, :, None, None] * xn + b[None, :, None, None]).astype(x.dtype)


if __name__ == "__main__":
    key = jax.random.PRNGKey(0)
    k1, k2, k3, k4, k5, k6 = jax.random.split(key, 6)

    B, C, H, W = 2, 4, 16, 16
    eps = 1e-6

    # --- channels_first (NCHW), non-trivial affine params ----------------------
    x_cf = jax.random.normal(k1, (B, C, H, W), dtype=jnp.float32)
    ln_cf = LayerNormPallas(C, eps=eps, data_format="channels_first")
    ln_cf.weight = jax.random.normal(k3, (C,), dtype=jnp.float32)
    ln_cf.bias = jax.random.normal(k4, (C,), dtype=jnp.float32)
    y_cf = jax.block_until_ready(ln_cf(x_cf))
    ref_cf = _ref_channels_first(x_cf, ln_cf.weight, ln_cf.bias, eps)
    assert y_cf.shape == (B, C, H, W)
    assert jnp.allclose(y_cf, ref_cf, atol=1e-5, rtol=1e-5)

    # --- channels_last ----------------------------------------------------------
    x_cl = jax.random.normal(k2, (B, H, W, C), dtype=jnp.float32)
    ln_cl = LayerNormPallas(C, eps=eps, data_format="channels_last")
    ln_cl.weight = ln_cf.weight
    ln_cl.bias = ln_cf.bias
    y_cl = jax.block_until_ready(ln_cl(x_cl))
    ref_cl = _ref_channels_last(x_cl, ln_cl.weight, ln_cl.bias, eps)
    assert y_cl.shape == (B, H, W, C)
    assert jnp.allclose(y_cl, ref_cl, atol=1e-5, rtol=1e-5)

    # --- non-divisible row count (tail-block handling, no pad/slice) ------------
    x_odd = jax.random.normal(k5, (2, 5, 7, 32), dtype=jnp.float32)  # R=70 rows
    y_odd = jax.block_until_ready(
        _layernorm_rows(x_odd.reshape(-1, 32),
                        jnp.ones((32,), jnp.float32),
                        jnp.zeros((32,), jnp.float32),
                        eps).reshape(2, 5, 7, 32)
    )
    ref_odd = _ref_channels_last(x_odd, jnp.ones((32,)), jnp.zeros((32,)), eps)
    assert jnp.allclose(y_odd, ref_odd, atol=1e-5, rtol=1e-5)

    # --- channels_first small-spatial stage: exercises batch-folded blocks ------
    x_bf16hw = jax.random.normal(k6, (16, 8, 7, 7), dtype=jnp.float32)
    ln_small = LayerNormPallas(8, eps=eps, data_format="channels_first")
    y_small = jax.block_until_ready(ln_small(x_bf16hw))
    ref_small = _ref_channels_first(x_bf16hw, ln_small.weight, ln_small.bias, eps)
    assert jnp.allclose(y_small, ref_small, atol=1e-5, rtol=1e-5)

    # --- bf16 in / bf16 out (half the HBM traffic; math stays f32 in-kernel) ----
    x_bf = x_cf.astype(jnp.bfloat16)
    y_bf = jax.block_until_ready(ln_cf(x_bf))
    ref_bf = _ref_channels_first(x_bf, ln_cf.weight, ln_cf.bias, eps)
    assert y_bf.dtype == jnp.bfloat16
    assert jnp.allclose(y_bf.astype(jnp.float32), ref_bf.astype(jnp.float32),
                        atol=2e-2, rtol=2e-2)

    print("KERNEL_OK")
</pallas_src>

<mosaic_0001>
module attributes {stable_mosaic.version = 11 : i64} {
  func.func @_ln_channels_kernel(%arg0: i32, %arg1: i32, %arg2: memref<1x4x128xf32, #tpu.memory_space<vmem>>, %arg3: memref<1x4x1xf32, #tpu.memory_space<vmem>>, %arg4: memref<1x4x1xf32, #tpu.memory_space<vmem>>, %arg5: memref<1x4x128xf32, #tpu.memory_space<vmem>>) attributes {dimension_semantics = [#tpu.dimension_semantics<parallel>, #tpu.dimension_semantics<parallel>], iteration_bounds = array<i64: 2, 2>, scalar_prefetch = 0 : i64, scratch_operands = 0 : i64, tpu.core_type = #tpu.core_type<tc>, window_params = [{transform_indices = @transform_0, window_bounds = array<i64: 1, 4, 128>}, {pipeline_mode = #tpu.pipeline_mode<synchronous>, transform_indices = @transform_1, window_bounds = array<i64: 1, 4, 1>}, {pipeline_mode = #tpu.pipeline_mode<synchronous>, transform_indices = @transform_2, window_bounds = array<i64: 1, 4, 1>}, {transform_indices = @transform_3, window_bounds = array<i64: 1, 4, 128>}]} {
    %c0 = arith.constant 0 : index
    %c0_0 = arith.constant 0 : index
    %c0_1 = arith.constant 0 : index
    %0 = vector.load %arg2[%c0, %c0_0, %c0_1] : memref<1x4x128xf32, #tpu.memory_space<vmem>>, vector<1x4x128xf32>
    %cst = arith.constant dense<0.000000e+00> : vector<1x128xf32>
    %1 = vector.multi_reduction <add>, %0, %cst [1] : vector<1x4x128xf32> to vector<1x128xf32>
    %2 = vector.shape_cast %1 : vector<1x128xf32> to vector<1x1x128xf32>
    %cst_2 = arith.constant 4.000000e+00 : f32
    %3 = vector.broadcast %cst_2 : f32 to vector<1x1x128xf32>
    %4 = arith.divf %2, %3 : vector<1x1x128xf32>
    %5 = arith.mulf %0, %0 : vector<1x4x128xf32>
    %cst_3 = arith.constant dense<0.000000e+00> : vector<1x128xf32>
    %6 = vector.multi_reduction <add>, %5, %cst_3 [1] : vector<1x4x128xf32> to vector<1x128xf32>
    %7 = vector.shape_cast %6 : vector<1x128xf32> to vector<1x1x128xf32>
    %cst_4 = arith.constant 4.000000e+00 : f32
    %8 = vector.broadcast %cst_4 : f32 to vector<1x1x128xf32>
    %9 = arith.divf %7, %8 : vector<1x1x128xf32>
    %10 = arith.mulf %4, %4 : vector<1x1x128xf32>
    %11 = arith.subf %9, %10 : vector<1x1x128xf32>
    %cst_5 = arith.constant 0.000000e+00 : f32
    %12 = vector.broadcast %cst_5 : f32 to vector<1x1x128xf32>
    %13 = arith.maximumf %11, %12 : vector<1x1x128xf32>
    %cst_6 = arith.constant 9.99999997E-7 : f32
    %14 = vector.broadcast %cst_6 : f32 to vector<1x1x128xf32>
    %15 = arith.addf %13, %14 : vector<1x1x128xf32>
    %16 = math.rsqrt %15 : vector<1x1x128xf32>
    %c0_7 = arith.constant 0 : index
    %c0_8 = arith.constant 0 : index
    %c0_9 = arith.constant 0 : index
    %17 = vector.load %arg3[%c0_7, %c0_8, %c0_9] : memref<1x4x1xf32, #tpu.memory_space<vmem>>, vector<1x4x1xf32>
    %c0_10 = arith.constant 0 : index
    %c0_11 = arith.constant 0 : index
    %c0_12 = arith.constant 0 : index
    %18 = vector.load %arg4[%c0_10, %c0_11, %c0_12] : memref<1x4x1xf32, #tpu.memory_space<vmem>>, vector<1x4x1xf32>
    %19 = vector.broadcast %4 : vector<1x1x128xf32> to vector<1x4x128xf32>
    %20 = arith.subf %0, %19 : vector<1x4x128xf32>
    %21 = vector.broadcast %16 : vector<1x1x128xf32> to vector<1x4x128xf32>
    %22 = arith.mulf %20, %21 : vector<1x4x128xf32>
    %23 = vector.broadcast %17 : vector<1x4x1xf32> to vector<1x4x128xf32>
    %24 = arith.mulf %22, %23 : vector<1x4x128xf32>
    %25 = vector.broadcast %18 : vector<1x4x1xf32> to vector<1x4x128xf32>
    %26 = arith.addf %24, %25 : vector<1x4x128xf32>
    %c0_13 = arith.constant 0 : index
    %c0_14 = arith.constant 0 : index
    %c0_15 = arith.constant 0 : index
    %27 = vector.load %arg5[%c0_13, %c0_14, %c0_15] : memref<1x4x128xf32, #tpu.memory_space<vmem>>, vector<1x4x128xf32>
    tpu.vector_store %arg5[%c0_13, %c0_14, %c0_15], %26 {strides = array<i32>} : memref<1x4x128xf32, #tpu.memory_space<vmem>>, vector<1x4x128xf32>,
    return
  }
  func.func @transform_0(%arg0: i32, %arg1: i32) -> (i32, i32, i32) {
    %c0_i32 = arith.constant 0 : i32
    %c0_i32_0 = arith.constant 0 : i32
    return %arg0, %c0_i32, %arg1 : i32, i32, i32
  }
  func.func @transform_1(%arg0: i32, %arg1: i32) -> (i32, i32, i32) {
    %c0_i32 = arith.constant 0 : i32
    %c0_i32_0 = arith.constant 0 : i32
    %c0_i32_1 = arith.constant 0 : i32
    %c0_i32_2 = arith.constant 0 : i32
    return %c0_i32, %c0_i32_0, %c0_i32_1 : i32, i32, i32
  }
  func.func @transform_2(%arg0: i32, %arg1: i32) -> (i32, i32, i32) {
    %c0_i32 = arith.constant 0 : i32
    %c0_i32_0 = arith.constant 0 : i32
    %c0_i32_1 = arith.constant 0 : i32
    %c0_i32_2 = arith.constant 0 : i32
    return %c0_i32, %c0_i32_0, %c0_i32_1 : i32, i32, i32
  }
  func.func @transform_3(%arg0: i32, %arg1: i32) -> (i32, i32, i32) {
    %c0_i32 = arith.constant 0 : i32
    %c0_i32_0 = arith.constant 0 : i32
    return %arg0, %c0_i32, %arg1 : i32, i32, i32
  }
}

</mosaic_0001>

<llo_original>
// kernel: tpu_custom_call.1
$region0: #{tpu_custom_call.1}
  #allocation0 [shape = 'u32[]', space=smem, size = 0x4, offset = 0x4, fixed_abs, tag = 'smem constant byte address 0x4 - core index']
  #allocation1 [shape = 'u32[72,128]{1,0:T(1,128)}', space=vmem, size = 0x9000, scoped, tag = 'internal scratch']
  %s0 = inlined_call_operand.hbm [shape: f32[2,4,256], index: 0, kind: input, shape index: {}]
  %s1 = inlined_call_operand.vmem [shape: f32[1,4,1], index: 1, kind: input, shape index: {}]
  %s2 = inlined_call_operand.vmem [shape: f32[1,4,1], index: 2, kind: input, shape index: {}]
  %s3 = inlined_call_operand.hbm [shape: f32[2,4,256], index: 3, kind: output, shape index: {}]
  %s4 = sld [smem:[#allocation0]]
  $region49: #{tpu_custom_call.1} parent=0
    _
  %s6 = ssub.s32 1, %s4
  %s7 = scalar_select 0, %s6, %s4
  $region1: #{tpu_custom_call.1} parent=0
    #allocation2 [shape = 'u8[4096]{0}', space=vmem, size = 0x1000, scoped, tag = 'input window, operand 0']
    #allocation3 [shape = 's32[2]{0}', space=sflag, size = 0x8, scoped, tag = 'scoped memory for tpu_custom_call.1']
    #allocation4 [shape = 's32[2]{0}', space=sflag, size = 0x8, scoped, tag = 'scoped memory for tpu_custom_call.1']
    #allocation5 [shape = 'u8[4096]{0}', space=vmem, size = 0x1000, scoped, tag = 'output window, operand 0']
    %8 = vsyncpa [#allocation3], 0
    %s9 = scalar_lea.sflag [#allocation3], 1
    %10 = vsyncpa %s9, 0
    %11 = vsyncpa [#allocation4], 0
    %s12 = scalar_lea.sflag [#allocation4], 1
    %13 = vsyncpa %s12, 0
    loop: start=0, step=1, limit=6
    $region2: #{tpu_custom_call.1} parent=1 // loop_pre_header
      _
    $region3: #{tpu_custom_call.1} parent=1 // loop_header
      %s15 = sphi 0, %s19
      %p16 = scmp.ge.s32.totalorder %s15, 6
      %s22 = sphi 0, %s34
      %s23 = sphi 0, %s30
      %s24 = sphi 0, %s22
      %s25 = sphi 0, %s23
      %s26 = sphi 0, %s24
      %s27 = sphi 0, %s25
      %s39 = sphi 0, %s41
      %s42 = sphi 0, %s39
      %s43 = sphi 0, %s42
      %s59 = sphi 0, %s43
      %s63 = sphi 0, %s63
      %s65 = sphi 0, %s63
      %s66 = sphi 0, %s65
      %s80 = sphi 0, %s66
      %s84 = sphi 0, %s84
      %s86 = sphi 0, %s84
      %s87 = sphi 0, %s86
      %s101 = sphi 0, %s87
      %s109 = sphi 0, %s111
      %s112 = sphi 0, %s109
      %s113 = sphi 0, %s112
      %s129 = sphi 0, %s113
    $region4: #{tpu_custom_call.1} parent=1 // loop_header_branch
      %18 = sbr.rel (%p16) target = $region8
    $region5: #{tpu_custom_call.1} parent=1 // loop_body
      %s20 = ssub.s32 %s15, 1
      %s21 = ssub.s32 %s15, 2
      %s28 = sadd.s32 1, %s23
      %p29 = scmp.ge.s32.totalorder %s28, 2
      %s30 = scalar_select %p29, 0, %s28
      %s31 = sadd.s32 1, %s22
      %s32 = scalar_select %p29, %s31, %s22
      %p33 = scmp.ge.s32.totalorder %s32, 2
      %s34 = scalar_select %p33, 0, %s32
      %s35 = ssub.s32 %s22, %s34
      %s36 = ssub.s32 %s23, %s30
      %s37 = sor.u32 %s35, %s36
      %p38 = scmp.eq.s32.totalorder %s37, 0
      %s40 = sadd.s32 %s39, 1
      %s41 = scalar_select %p38, %s39, %s40
      %p44 = pneg %p38
      %p45 = scmp.eq.s32.totalorder %s15, 3
      %p46 = por %p44, %p45
      %p47 = scmp.ne.s32.totalorder %s39, %s42
      %p48 = scmp.eq.s32.totalorder %s15, 0
      %p49 = por %p47, %p48
      %p50 = scmp.ne.s32.totalorder %s39, %s42
      %p51 = scmp.eq.s32.totalorder %s20, 3
      %p52 = por %p50, %p51
      %p53 = scmp.ne.s32.totalorder %s42, %s43
      %p54 = scmp.eq.s32.totalorder %s20, 0
      %p55 = por %p53, %p54
      %p56 = scmp.ne.s32.totalorder %s42, %s43
      %p57 = scmp.eq.s32.totalorder %s21, 3
      %p58 = por %p56, %p57
      %p60 = scmp.ne.s32.totalorder %s43, %s59
      %p61 = scmp.eq.s32.totalorder %s21, 0
      %p62 = por %p60, %p61
      %s64 = sadd.s32 %s63, 1
      %p67 = scmp.eq.s32.totalorder %s15, 3
      %p68 = scmp.ne.s32.totalorder %s63, %s65
      %p69 = scmp.eq.s32.totalorder %s15, 0
      %p70 = por %p68, %p69
      %p71 = scmp.ne.s32.totalorder %s63, %s65
      %p72 = scmp.eq.s32.totalorder %s20, 3
      %p73 = por %p71, %p72
      %p74 = scmp.ne.s32.totalorder %s65, %s66
      %p75 = scmp.eq.s32.totalorder %s20, 0
      %p76 = por %p74, %p75
      %p77 = scmp.ne.s32.totalorder %s65, %s66
      %p78 = scmp.eq.s32.totalorder %s21, 3
      %p79 = por %p77, %p78
      %p81 = scmp.ne.s32.totalorder %s66, %s80
      %p82 = scmp.eq.s32.totalorder %s21, 0
      %p83 = por %p81, %p82
      %s85 = sadd.s32 %s84, 1
      %p88 = scmp.eq.s32.totalorder %s15, 3
      %p89 = scmp.ne.s32.totalorder %s84, %s86
      %p90 = scmp.eq.s32.totalorder %s15, 0
      %p91 = por %p89, %p90
      %p92 = scmp.ne.s32.totalorder %s84, %s86
      %p93 = scmp.eq.s32.totalorder %s20, 3
      %p94 = por %p92, %p93
      %p95 = scmp.ne.s32.totalorder %s86, %s87
      %p96 = scmp.eq.s32.totalorder %s20, 0
      %p97 = por %p95, %p96
      %p98 = scmp.ne.s32.totalorder %s86, %s87
      %p99 = scmp.eq.s32.totalorder %s21, 3
      %p100 = por %p98, %p99
      %p102 = scmp.ne.s32.totalorder %s87, %s101
      %p103 = scmp.eq.s32.totalorder %s21, 0
      %p104 = por %p102, %p103
      %s105 = ssub.s32 %s22, %s34
      %s106 = ssub.s32 %s23, %s30
      %s107 = sor.u32 %s105, %s106
      %p108 = scmp.eq.s32.totalorder %s107, 0
      %s110 = sadd.s32 %s109, 1
      %s111 = scalar_select %p108, %s109, %s110
      %p114 = pneg %p108
      %p115 = scmp.eq.s32.totalorder %s15, 3
      %p116 = por %p114, %p115
      %p117 = scmp.ne.s32.totalorder %s109, %s112
      %p118 = scmp.eq.s32.totalorder %s15, 0
      %p119 = por %p117, %p118
      %p120 = scmp.ne.s32.totalorder %s109, %s112
      %p121 = scmp.eq.s32.totalorder %s20, 3
      %p122 = por %p120, %p121
      %p123 = scmp.ne.s32.totalorder %s112, %s113
      %p124 = scmp.eq.s32.totalorder %s20, 0
      %p125 = por %p123, %p124
      %p126 = scmp.ne.s32.totalorder %s112, %s113
      %p127 = scmp.eq.s32.totalorder %s21, 3
      %p128 = por %p126, %p127
      %p130 = scmp.ne.s32.totalorder %s113, %s129
      %p131 = scmp.eq.s32.totalorder %s21, 0
      %p132 = por %p130, %p131
      %p133 = scmp.le.s32.totalorder 1, %s15
      %p134 = scmp.lt.s32.totalorder %s15, 5
      %p135 = pnand %p133, %p134
      %p136 = pneg %p135
      // Predicated region
      $region9: #{tpu_custom_call.1} parent=5 // pred_check
        _
      $region10: #{tpu_custom_call.1} parent=5 // pred_check_branch
        %138 = sbr.rel (%p135) target = $region12
      $region11: #{tpu_custom_call.1} parent=5 // pred_region
        %s139 = ssub.s32 %s15, 1
        // Predicated region
        $region13: #{tpu_custom_call.1} parent=11 // pred_check
          %p140 = pneg %p76
        $region14: #{tpu_custom_call.1} parent=11 // pred_check_branch
          %142 = sbr.rel (%p140) target = $region16
        $region15: #{tpu_custom_call.1} parent=11 // pred_region
          _
        $region16: #{tpu_custom_call.1} parent=11 // pred_fallthru
          _
        // Predicated region
        $region17: #{tpu_custom_call.1} parent=11 // pred_check
          %p143 = pneg %p97
        $region18: #{tpu_custom_call.1} parent=11 // pred_check_branch
          %145 = sbr.rel (%p143) target = $region20
        $region19: #{tpu_custom_call.1} parent=11 // pred_region
          _
        $region20: #{tpu_custom_call.1} parent=11 // pred_fallthru
          _
      $region12: #{tpu_custom_call.1} parent=5 // pred_fallthru
        _
      %p146 = scmp.lt.s32.totalorder %s15, 4
      // Predicated region
      $region21: #{tpu_custom_call.1} parent=5 // pred_check
        %p147 = pneg %p146
      $region22: #{tpu_custom_call.1} parent=5 // pred_check_branch
        %149 = sbr.rel (%p147) target = $region24
      $region23: #{tpu_custom_call.1} parent=5 // pred_region
        // Predicated region
        $region25: #{tpu_custom_call.1} parent=23 // pred_check
          %p150 = pneg %p49
        $region26: #{tpu_custom_call.1} parent=23 // pred_check_branch
          %152 = sbr.rel (%p150) target = $region28
        $region27: #{tpu_custom_call.1} parent=23 // pred_region
          %s153 = sand.u32 %s39, 1
          %s154 = scalar_lea.sflag [#allocation3], %s153
          %s155 = sand.u32 %s39, 1
          %s156 = smul.addr %s155, 4
          %s157 = scalar_lea.vmem [#allocation2], %s156
          %159 = vsyncadd %s154, 0
          %s160 = smul.addr %s22, 2
          %s161 = sadd.s32 %s23, %s160
          %s162 = smul.addr %s161, 4
          %s163 = scalar_lea.hbm %s0, %s162
          %s165 = sshll.u32 %s163, 4
          %s166 = int_to_ptr.hbm [resolvable:$true] %s165
          %s167 = sshll.u32 %s157, 4
          %s168 = int_to_ptr.vmem [resolvable:$true] %s167
          %170 = dma.hbm_to_vmem [thread:$0]  %s166, 64, %s168, %s154
        $region28: #{tpu_custom_call.1} parent=23 // pred_fallthru
          _
      $region24: #{tpu_custom_call.1} parent=5 // pred_fallthru
        _
      %p171 = scmp.le.s32.totalorder 1, %s15
      %p172 = scmp.lt.s32.totalorder %s15, 5
      %p173 = pnand %p171, %p172
      %p174 = pneg %p173
      // Predicated region
      $region29: #{tpu_custom_call.1} parent=5 // pred_check
        _
      $region30: #{tpu_custom_call.1} parent=5 // pred_check_branch
        %176 = sbr.rel (%p173) target = $region32
      $region31: #{tpu_custom_call.1} parent=5 // pred_region
        %s177 = ssub.s32 %s15, 1
        %s178 = sand.u32 %s42, 1
        %s179 = scalar_lea.sflag [#allocation3], %s178
        %s180 = sand.u32 %s42, 1
        %s181 = smul.addr %s180, 4
        %s182 = scalar_lea.vmem [#allocation2], %s181
        // Predicated region
        $region33: #{tpu_custom_call.1} parent=31 // pred_check
          %p183 = pneg %p55
        $region34: #{tpu_custom_call.1} parent=31 // pred_check_branch
          %185 = sbr.rel (%p183) target = $region36
        $region35: #{tpu_custom_call.1} parent=31 // pred_region
          %187 = dma.done %s179, 64
        $region36: #{tpu_custom_call.1} parent=31 // pred_fallthru
          _
        %s188 = sand.u32 %s42, 1
        %s189 = scalar_lea.sflag [#allocation3], %s188
        %s190 = sand.u32 %s42, 1
        %s191 = smul.addr %s190, 4
        %s192 = scalar_lea.vmem [#allocation2], %s191
        %p193 = pneg %p55
        %p194 = pneg %p52
        %p195 = pneg %p76
        %p196 = pneg %p73
        %p197 = pneg %p97
        %p198 = pneg %p94
        %p199 = pneg %p125
        %p200 = pneg %p122
        %s201 = sand.u32 %s112, 1
        %s202 = scalar_lea.sflag [#allocation4], %s201
        %s203 = sand.u32 %s112, 1
        %s204 = smul.addr %s203, 4
        %s205 = scalar_lea.vmem [#allocation5], %s204
        %v206 = vld [vmem:[%s182] sm:$0xf]
        %vm207 = vcmask 1043456
        %v208 = vsel %vm207, %v206, 0.0
        %v209 = vrot.slane %v208, 4
        %v210 = vadd.f32 %v208, %v209
        %v211 = vrot.slane %v210, 2
        %v212 = vadd.f32 %v210, %v211
        %v213 = vrot.slane %v212, 1
        %v214 = vadd.f32 %v212, %v213
        %v215 = vrcp.pop 4.0
        %v216 = vmul.f32 4.0, %v215
        %v217 = vsub.f32 1.0, %v216
        %v218 = vmul.f32 %v215, %v217
        %v219 = vadd.f32 %v215, %v218
        %vm220 = vweird.f32 %v215
        %v221 = vsel %vm220, %v215, %v219
        %v222 = vmul.f32 %v214, %v221
        %v223 = vmul.f32 %v206, %v206
        %v224 = vsel %vm207, %v223, 0.0
        %v225 = vrot.slane %v224, 4
        %v226 = vadd.f32 %v224, %v225
        %v227 = vrot.slane %v226, 2
        %v228 = vadd.f32 %v226, %v227
        %v229 = vrot.slane %v228, 1
        %v230 = vadd.f32 %v228, %v229
        %v231 = vmul.f32 %v230, %v221
        %v232 = vmul.f32 %v222, %v222
        %v233 = vsub.f32 %v231, %v232
        %v234 = vmax.f32 %v233, 0.0
        %v235 = vadd.f32 %v234, 1e-06
        %v236 = vrsqrt.pop %v235
        %v237 = vmul.f32 %v236, %v235
        %v238 = vmul.f32 %v237, %v236
        %v239 = vmul.f32 0.5, %v238
        %v240 = vsub.f32 1.5, %v239
        %v241 = vmul.f32 %v236, %v240
        %vm242 = vweird.f32 %v235
        %vm243 = vweird.f32 %v236
        %vm244 = vmor %vm242, %vm243
        %v245 = vsel %vm244, %v236, %v241
        %v246 = vld [vmem:[%s1] sm:$0xf]
        %v247 = vld [vmem:[%s2] sm:$0xf]
        %v248 = vsub.f32 %v206, %v222
        %v249 = vmul.f32 %v248, %v245
        %251 = vset.pattern.permute.xlu0 0
        %252 = vperm.xlu0 %251, %v246
        %v253 = vpop.permute.xlu0 %252
        %v255 = vmul.f32 %v249, %v253
        %257 = vset.pattern.permute.xlu0 0
        %258 = vperm.xlu0 %257, %v247
        %v259 = vpop.permute.xlu0 %258
        %v261 = vadd.f32 %v255, %v259
        %262 = vst [vmem:[%s205] sm:$0xf] %v261
        %s263 = sand.u32 %s112, 1
        %s264 = scalar_lea.sflag [#allocation4], %s263
        %s265 = sand.u32 %s112, 1
        %s266 = smul.addr %s265, 4
        %s267 = scalar_lea.vmem [#allocation5], %s266
        // Predicated region
        $region37: #{tpu_custom_call.1} parent=31 // pred_check
          %p268 = pneg %p122
        $region38: #{tpu_custom_call.1} parent=31 // pred_check_branch
          %270 = sbr.rel (%p268) target = $region40
        $region39: #{tpu_custom_call.1} parent=31 // pred_region
          %272 = vsyncadd %s264, 0
          %s273 = smul.addr %s24, 2
          %s274 = sadd.s32 %s25, %s273
          %s275 = smul.addr %s274, 4
          %s276 = scalar_lea.hbm %s3, %s275
          %s278 = sshll.u32 %s267, 4
          %s279 = int_to_ptr.vmem [resolvable:$true] %s278
          %s280 = sshll.u32 %s276, 4
          %s281 = int_to_ptr.hbm [resolvable:$true] %s280
          %283 = dma.vmem_to_hbm [thread:$0]  %s279, 64, %s281, %s264
        $region40: #{tpu_custom_call.1} parent=31 // pred_fallthru
          _
      $region32: #{tpu_custom_call.1} parent=5 // pred_fallthru
        _
      %p284 = scmp.le.s32.totalorder 2, %s15
      // Predicated region
      $region41: #{tpu_custom_call.1} parent=5 // pred_check
        %p285 = pneg %p284
      $region42: #{tpu_custom_call.1} parent=5 // pred_check_branch
        %287 = sbr.rel (%p285) target = $region44
      $region43: #{tpu_custom_call.1} parent=5 // pred_region
        %s288 = ssub.s32 %s15, 2
        // Predicated region
        $region45: #{tpu_custom_call.1} parent=43 // pred_check
          %p289 = pneg %p128
        $region46: #{tpu_custom_call.1} parent=43 // pred_check_branch
          %291 = sbr.rel (%p289) target = $region48
        $region47: #{tpu_custom_call.1} parent=43 // pred_region
          %s292 = sand.u32 %s113, 1
          %s293 = scalar_lea.sflag [#allocation4], %s292
          %s294 = sand.u32 %s113, 1
          %s295 = smul.addr %s294, 4
          %s296 = scalar_lea.vmem [#allocation5], %s295
          %298 = dma.done %s293, 64
        $region48: #{tpu_custom_call.1} parent=43 // pred_fallthru
          _
      $region44: #{tpu_custom_call.1} parent=5 // pred_fallthru
        _
    $region6: #{tpu_custom_call.1} parent=1 // loop_footer
      %s19 = sadd.s32 1, %s15
    $region7: #{tpu_custom_call.1} parent=1 // loop_footer_branch
      %14 = sbr.rel target = $region3
    $region8: #{tpu_custom_call.1} parent=1 // loop_exit
      _
    %299 = vsyncpa [#allocation3], 1
    %s300 = scalar_lea.sflag [#allocation3], 1
    %301 = vsyncpa %s300, 1
    %302 = vsyncpa [#allocation4], 1
    %s303 = scalar_lea.sflag [#allocation4], 1
    %304 = vsyncpa %s303, 1

</llo_original>
